<compile_context>
chip_gen: v6e
topology: v6e:2x2x1
jax: 0.10.0
libtpu: 0.0.40
codegen_flags: <defaults>
</compile_context>

<pallas_src>
import functools

import jax
import jax.numpy as jnp
from jax.experimental import pallas as pl
from jax.experimental.pallas import tpu as pltpu


def _rope_full_kernel(x_ref, cos_ref, sin_ref, o_ref, *, half):
    # Full-rotary path (d == D). rotate_half == lane rotation by d/2 (XLU),
    # sin table already carries the [-sin, sin] sign pattern.
    x = x_ref[...].astype(jnp.float32)            # (bn, s, D)
    rotated = pltpu.roll(x, shift=half, axis=2)   # [x2, x1] along lanes
    o_ref[...] = (x * cos_ref[...] + rotated * sin_ref[...]).astype(o_ref.dtype)


def _rope_partial_kernel(x_ref, cos_ref, sin_ref, o_ref, *, d, half):
    # Partial-rotary path (d < D). Rotary math on the leading d lanes with
    # half-width tables; the pass-through tail is fused so we still do a
    # single full-width (lane-dense) store and never round-trip x through HBM
    # for a wrapper-side slice/concat.
    x = x_ref[...].astype(jnp.float32)            # (bn, s, D)
    cos = cos_ref[...]                            # (s, d/2)
    sin = sin_ref[...]                            # (s, d/2)
    x1 = x[..., :half]
    x2 = x[..., half:d]
    out1 = x1 * cos - x2 * sin
    out2 = x2 * cos + x1 * sin
    o_ref[...] = jnp.concatenate(
        [out1, out2, x[..., d:]], axis=-1).astype(o_ref.dtype)


def pallas_rotary_embedding(x, d, base=10000, offset=0, position_ids=None):
    """RotaryEmbedding(d, base).forward(x, offset) for x of shape (B, N, S, D)."""
    if position_ids is not None:
        # TODO(synk): per-token position_ids gather path not implemented; only
        # contiguous positions offset..offset+S-1 are supported.
        raise NotImplementedError("position_ids is not supported by this kernel")

    B, N, S, D = x.shape
    if d % 2 != 0:
        raise ValueError("d must be divisible by 2")
    if d > D:
        raise ValueError(f"rotary dim d={d} exceeds head dim D={D}")
    half = d // 2

    # Angle tables (float32, matching the torch module's cached tables).
    theta = 1.0 / jnp.power(
        jnp.float32(base), jnp.arange(0, d, 2, dtype=jnp.float32) / jnp.float32(d))
    pos = jnp.arange(S, dtype=jnp.float32) + jnp.float32(offset)
    ang = pos[:, None] * theta[None, :]                       # (S, d/2)

    full_rotary = (d == D)
    if full_rotary:
        # Full-width tables; rotate-half's sign folded into sin.
        cos_t = jnp.concatenate([jnp.cos(ang), jnp.cos(ang)], axis=-1)    # (S, D)
        sin_t = jnp.concatenate([-jnp.sin(ang), jnp.sin(ang)], axis=-1)   # (S, D)
        kernel = functools.partial(_rope_full_kernel, half=half)
        tbl_w = D
    else:
        cos_t = jnp.cos(ang)                                   # (S, d/2)
        sin_t = jnp.sin(ang)
        kernel = functools.partial(_rope_partial_kernel, d=d, half=half)
        tbl_w = half

    BN = B * N
    x3 = x.reshape(BN, S, D)

    # ---- Block sizing -----------------------------------------------------
    # ~4 MiB x-blocks: big enough to sit near the HBM roofline on v5e/v6e,
    # small enough that 2 in + 2 out double-buffers + f32 temps + tables stay
    # well under v7x's VMEM even for bf16 inputs.
    itemsize = jnp.dtype(x.dtype).itemsize
    row_bytes = D * itemsize
    target_block_bytes = 4 * 1024 * 1024
    if S * row_bytes <= target_block_bytes:
        s_tile = S                                    # full seq fits in a block
    else:
        s_tile = max(8, (target_block_bytes // row_bytes) // 8 * 8)  # mult. of 8
    bn_tile = max(1, target_block_bytes // (s_tile * row_bytes))
    bn_tile = min(bn_tile, BN)
    if BN >= 2:
        # keep >=2 steps on the parallel axis so both v7x TensorCores get work
        bn_tile = min(bn_tile, -(-BN // 2))
    grid = (pl.cdiv(BN, bn_tile), pl.cdiv(S, s_tile))

    out3 = pl.pallas_call(
        kernel,
        out_shape=jax.ShapeDtypeStruct((BN, S, D), x.dtype),
        grid_spec=pltpu.PrefetchScalarGridSpec(
            num_scalar_prefetch=0,
            grid=grid,
            in_specs=[
                pl.BlockSpec((bn_tile, s_tile, D), lambda i, j: (i, j, 0)),
                pl.BlockSpec((s_tile, tbl_w), lambda i, j: (j, 0)),
                pl.BlockSpec((s_tile, tbl_w), lambda i, j: (j, 0)),
            ],
            out_specs=pl.BlockSpec((bn_tile, s_tile, D), lambda i, j: (i, j, 0)),
        ),
        compiler_params=pltpu.CompilerParams(
            dimension_semantics=("parallel", "arbitrary"),
            vmem_limit_bytes=48 * 1024 * 1024,
        ),
    )(x3, cos_t, sin_t)

    return out3.reshape(B, N, S, D)


def rope_reference(x, d, base=10000, offset=0):
    """Pure-JAX reference matching the PyTorch module."""
    B, N, S, D = x.shape
    x_rope = x[..., :d]
    x_pass = x[..., d:] if d < D else None
    theta = 1.0 / jnp.power(
        jnp.float32(base), jnp.arange(0, d, 2, dtype=jnp.float32) / jnp.float32(d))
    pos = jnp.arange(S, dtype=jnp.float32) + jnp.float32(offset)
    idx = pos[:, None] * theta[None, :]
    idx = jnp.concatenate([idx, idx], axis=-1)                # (S, d)
    cos = jnp.cos(idx)
    sin = jnp.sin(idx)
    half = d // 2
    neg_half = jnp.concatenate([-x_rope[..., half:], x_rope[..., :half]], axis=-1)
    out = x_rope * cos + neg_half * sin
    if x_pass is not None:
        out = jnp.concatenate([out.astype(x.dtype), x_pass], axis=-1)
    return out.astype(x.dtype)


if __name__ == "__main__":
    key = jax.random.PRNGKey(0)
    B, N, S, D = 2, 4, 16, 128   # (batch, heads, seq, head_dim)
    x = jax.random.normal(key, (B, N, S, D), dtype=jnp.float32)

    # Full-rotary case: d == D, offset = 0  (roll-based path)
    d = D
    out = jax.block_until_ready(pallas_rotary_embedding(x, d=d, base=10000, offset=0))
    ref = rope_reference(x, d=d, base=10000, offset=0)
    assert out.shape == (B, N, S, D), out.shape
    assert out.dtype == x.dtype
    assert jnp.allclose(out, ref, atol=1e-5, rtol=1e-5), "RoPE mismatch (d == D)"

    # Partial-rotary case with offset: d < D, pass-through fused in-kernel
    d2, off = 64, 3
    out2 = jax.block_until_ready(pallas_rotary_embedding(x, d=d2, base=10000, offset=off))
    ref2 = rope_reference(x, d=d2, base=10000, offset=off)
    assert out2.shape == (B, N, S, D)
    assert out2.dtype == x.dtype
    assert jnp.allclose(out2, ref2, atol=1e-5, rtol=1e-5), "RoPE mismatch (d < D, offset)"

    print("KERNEL_OK")
</pallas_src>

<mosaic_0001>
module attributes {stable_mosaic.version = 11 : i64} {
  func.func @_rope_full_kernel(%arg0: i32, %arg1: i32, %arg2: memref<4x16x128xf32, #tpu.memory_space<vmem>>, %arg3: memref<16x128xf32, #tpu.memory_space<vmem>>, %arg4: memref<16x128xf32, #tpu.memory_space<vmem>>, %arg5: memref<4x16x128xf32, #tpu.memory_space<vmem>>) attributes {dimension_semantics = [#tpu.dimension_semantics<parallel>, #tpu.dimension_semantics<arbitrary>], iteration_bounds = array<i64: 2, 1>, scalar_prefetch = 0 : i64, scratch_operands = 0 : i64, tpu.core_type = #tpu.core_type<tc>, window_params = [{transform_indices = @transform_0, window_bounds = array<i64: 4, 16, 128>}, {transform_indices = @transform_1, window_bounds = array<i64: 16, 128>}, {transform_indices = @transform_2, window_bounds = array<i64: 16, 128>}, {transform_indices = @transform_3, window_bounds = array<i64: 4, 16, 128>}]} {
    %c0 = arith.constant 0 : index
    %c0_0 = arith.constant 0 : index
    %c0_1 = arith.constant 0 : index
    %0 = vector.load %arg2[%c0, %c0_0, %c0_1] : memref<4x16x128xf32, #tpu.memory_space<vmem>>, vector<4x16x128xf32>
    %c64_i32 = arith.constant 64 : i32
    %1 = tpu.dynamic_rotate %0 by %c64_i32 dim 2 : vector<4x16x128xf32>, i32 -> vector<4x16x128xf32>
    %c0_2 = arith.constant 0 : index
    %c0_3 = arith.constant 0 : index
    %2 = vector.load %arg3[%c0_2, %c0_3] : memref<16x128xf32, #tpu.memory_space<vmem>>, vector<16x128xf32>
    %3 = vector.shape_cast %2 : vector<16x128xf32> to vector<1x16x128xf32>
    %4 = vector.broadcast %3 : vector<1x16x128xf32> to vector<4x16x128xf32>
    %5 = arith.mulf %0, %4 : vector<4x16x128xf32>
    %c0_4 = arith.constant 0 : index
    %c0_5 = arith.constant 0 : index
    %6 = vector.load %arg4[%c0_4, %c0_5] : memref<16x128xf32, #tpu.memory_space<vmem>>, vector<16x128xf32>
    %7 = vector.shape_cast %6 : vector<16x128xf32> to vector<1x16x128xf32>
    %8 = vector.broadcast %7 : vector<1x16x128xf32> to vector<4x16x128xf32>
    %9 = arith.mulf %1, %8 : vector<4x16x128xf32>
    %10 = arith.addf %5, %9 : vector<4x16x128xf32>
    %c0_6 = arith.constant 0 : index
    %c0_7 = arith.constant 0 : index
    %c0_8 = arith.constant 0 : index
    %11 = vector.load %arg5[%c0_6, %c0_7, %c0_8] : memref<4x16x128xf32, #tpu.memory_space<vmem>>, vector<4x16x128xf32>
    tpu.vector_store %arg5[%c0_6, %c0_7, %c0_8], %10 {strides = array<i32>} : memref<4x16x128xf32, #tpu.memory_space<vmem>>, vector<4x16x128xf32>,
    return
  }
  func.func @transform_0(%arg0: i32, %arg1: i32) -> (i32, i32, i32) {
    %c0_i32 = arith.constant 0 : i32
    %c0_i32_0 = arith.constant 0 : i32
    return %arg0, %arg1, %c0_i32 : i32, i32, i32
  }
  func.func @transform_1(%arg0: i32, %arg1: i32) -> (i32, i32) {
    %c0_i32 = arith.constant 0 : i32
    %c0_i32_0 = arith.constant 0 : i32
    return %arg1, %c0_i32 : i32, i32
  }
  func.func @transform_2(%arg0: i32, %arg1: i32) -> (i32, i32) {
    %c0_i32 = arith.constant 0 : i32
    %c0_i32_0 = arith.constant 0 : i32
    return %arg1, %c0_i32 : i32, i32
  }
  func.func @transform_3(%arg0: i32, %arg1: i32) -> (i32, i32, i32) {
    %c0_i32 = arith.constant 0 : i32
    %c0_i32_0 = arith.constant 0 : i32
    return %arg0, %arg1, %c0_i32 : i32, i32, i32
  }
}

</mosaic_0001>

<llo_original>
// kernel: tpu_custom_call.1
$region0: #{tpu_custom_call.1}
  #allocation0 [shape = 'u32[]', space=smem, size = 0x4, offset = 0x4, fixed_abs, tag = 'smem constant byte address 0x4 - core index']
  #allocation1 [shape = 'u32[144,128]{1,0:T(1,128)}', space=vmem, size = 0x12000, scoped, tag = 'internal scratch']
  %s0 = inlined_call_operand.hbm [shape: f32[8,16,128], index: 0, kind: input, shape index: {}]
  %s1 = inlined_call_operand.hbm [shape: f32[16,128], index: 1, kind: input, shape index: {}]
  %s2 = inlined_call_operand.hbm [shape: f32[16,128], index: 2, kind: input, shape index: {}]
  %s3 = inlined_call_operand.hbm [shape: f32[8,16,128], index: 3, kind: output, shape index: {}]
  %s4 = sld [smem:[#allocation0]]
  $region57: #{tpu_custom_call.1} parent=0
    _
  %s6 = ssub.s32 1, %s4
  %s7 = scalar_select 0, %s6, %s4
  $region1: #{tpu_custom_call.1} parent=0
    #allocation2 [shape = 'u8[65536]{0}', space=vmem, size = 0x10000, scoped, tag = 'input window, operand 0']
    #allocation3 [shape = 's32[2]{0}', space=sflag, size = 0x8, scoped, tag = 'scoped memory for tpu_custom_call.1']
    #allocation4 [shape = 's32[2]{0}', space=sflag, size = 0x8, scoped, tag = 'scoped memory for tpu_custom_call.1']
    #allocation5 [shape = 'u8[8192]{0}', space=vmem, size = 0x2000, scoped, tag = 'input window, operand 1, single buffered']
    #allocation6 [shape = 's32[1]{0}', space=sflag, size = 0x4, scoped, tag = 'scoped memory for tpu_custom_call.1']
    #allocation7 [shape = 'u8[8192]{0}', space=vmem, size = 0x2000, scoped, tag = 'input window, operand 2, single buffered']
    #allocation8 [shape = 'u8[65536]{0}', space=vmem, size = 0x10000, scoped, tag = 'output window, operand 0']
    %8 = vsyncpa [#allocation3], 0
    %s9 = scalar_lea.sflag [#allocation3], 1
    %10 = vsyncpa %s9, 0
    %11 = vsyncpa [#allocation6], 0
    %12 = vsyncpa [#allocation4], 0
    %s13 = scalar_lea.sflag [#allocation4], 1
    %14 = vsyncpa %s13, 0
    loop: start=0, step=1, limit=4
    $region2: #{tpu_custom_call.1} parent=1 // loop_pre_header
      _
    $region3: #{tpu_custom_call.1} parent=1 // loop_header
      %s16 = sphi 0, %s20
      %p17 = scmp.ge.s32.totalorder %s16, 4
      %s23 = sphi 0, %s35
      %s24 = sphi 0, %s31
      %s25 = sphi 0, %s23
      %s26 = sphi 0, %s24
      %s27 = sphi 0, %s25
      %s28 = sphi 0, %s26
      %s40 = sphi 0, %s42
      %s43 = sphi 0, %s40
      %s44 = sphi 0, %s43
      %s60 = sphi 0, %s44
      %s66 = sphi 0, %s68
      %s69 = sphi 0, %s66
      %s70 = sphi 0, %s69
      %s86 = sphi 0, %s70
      %s92 = sphi 0, %s94
      %s95 = sphi 0, %s92
      %s96 = sphi 0, %s95
      %s112 = sphi 0, %s96
      %s120 = sphi 0, %s122
      %s123 = sphi 0, %s120
      %s124 = sphi 0, %s123
      %s140 = sphi 0, %s124
    $region4: #{tpu_custom_call.1} parent=1 // loop_header_branch
      %19 = sbr.rel (%p17) target = $region8
    $region5: #{tpu_custom_call.1} parent=1 // loop_body
      %s21 = ssub.s32 %s16, 1
      %s22 = ssub.s32 %s16, 2
      %s29 = sadd.s32 1, %s24
      %p30 = scmp.ge.s32.totalorder %s29, 1
      %s31 = scalar_select %p30, 0, %s29
      %s32 = sadd.s32 1, %s23
      %s33 = scalar_select %p30, %s32, %s23
      %p34 = scmp.ge.s32.totalorder %s33, 2
      %s35 = scalar_select %p34, 0, %s33
      %s36 = ssub.s32 %s23, %s35
      %s37 = ssub.s32 %s24, %s31
      %s38 = sor.u32 %s36, %s37
      %p39 = scmp.eq.s32.totalorder %s38, 0
      %s41 = sadd.s32 %s40, 1
      %s42 = scalar_select %p39, %s40, %s41
      %p45 = pneg %p39
      %p46 = scmp.eq.s32.totalorder %s16, 1
      %p47 = por %p45, %p46
      %p48 = scmp.ne.s32.totalorder %s40, %s43
      %p49 = scmp.eq.s32.totalorder %s16, 0
      %p50 = por %p48, %p49
      %p51 = scmp.ne.s32.totalorder %s40, %s43
      %p52 = scmp.eq.s32.totalorder %s21, 1
      %p53 = por %p51, %p52
      %p54 = scmp.ne.s32.totalorder %s43, %s44
      %p55 = scmp.eq.s32.totalorder %s21, 0
      %p56 = por %p54, %p55
      %p57 = scmp.ne.s32.totalorder %s43, %s44
      %p58 = scmp.eq.s32.totalorder %s22, 1
      %p59 = por %p57, %p58
      %p61 = scmp.ne.s32.totalorder %s44, %s60
      %p62 = scmp.eq.s32.totalorder %s22, 0
      %p63 = por %p61, %p62
      %s64 = ssub.s32 %s24, %s31
      %p65 = scmp.eq.s32.totalorder %s64, 0
      %s67 = sadd.s32 %s66, 1
      %s68 = scalar_select %p65, %s66, %s67
      %p71 = pneg %p65
      %p72 = scmp.eq.s32.totalorder %s16, 1
      %p73 = por %p71, %p72
      %p74 = scmp.ne.s32.totalorder %s66, %s69
      %p75 = scmp.eq.s32.totalorder %s16, 0
      %p76 = por %p74, %p75
      %p77 = scmp.ne.s32.totalorder %s66, %s69
      %p78 = scmp.eq.s32.totalorder %s21, 1
      %p79 = por %p77, %p78
      %p80 = scmp.ne.s32.totalorder %s69, %s70
      %p81 = scmp.eq.s32.totalorder %s21, 0
      %p82 = por %p80, %p81
      %p83 = scmp.ne.s32.totalorder %s69, %s70
      %p84 = scmp.eq.s32.totalorder %s22, 1
      %p85 = por %p83, %p84
      %p87 = scmp.ne.s32.totalorder %s70, %s86
      %p88 = scmp.eq.s32.totalorder %s22, 0
      %p89 = por %p87, %p88
      %s90 = ssub.s32 %s24, %s31
      %p91 = scmp.eq.s32.totalorder %s90, 0
      %s93 = sadd.s32 %s92, 1
      %s94 = scalar_select %p91, %s92, %s93
      %p97 = pneg %p91
      %p98 = scmp.eq.s32.totalorder %s16, 1
      %p99 = por %p97, %p98
      %p100 = scmp.ne.s32.totalorder %s92, %s95
      %p101 = scmp.eq.s32.totalorder %s16, 0
      %p102 = por %p100, %p101
      %p103 = scmp.ne.s32.totalorder %s92, %s95
      %p104 = scmp.eq.s32.totalorder %s21, 1
      %p105 = por %p103, %p104
      %p106 = scmp.ne.s32.totalorder %s95, %s96
      %p107 = scmp.eq.s32.totalorder %s21, 0
      %p108 = por %p106, %p107
      %p109 = scmp.ne.s32.totalorder %s95, %s96
      %p110 = scmp.eq.s32.totalorder %s22, 1
      %p111 = por %p109, %p110
      %p113 = scmp.ne.s32.totalorder %s96, %s112
      %p114 = scmp.eq.s32.totalorder %s22, 0
      %p115 = por %p113, %p114
      %s116 = ssub.s32 %s23, %s35
      %s117 = ssub.s32 %s24, %s31
      %s118 = sor.u32 %s116, %s117
      %p119 = scmp.eq.s32.totalorder %s118, 0
      %s121 = sadd.s32 %s120, 1
      %s122 = scalar_select %p119, %s120, %s121
      %p125 = pneg %p119
      %p126 = scmp.eq.s32.totalorder %s16, 1
      %p127 = por %p125, %p126
      %p128 = scmp.ne.s32.totalorder %s120, %s123
      %p129 = scmp.eq.s32.totalorder %s16, 0
      %p130 = por %p128, %p129
      %p131 = scmp.ne.s32.totalorder %s120, %s123
      %p132 = scmp.eq.s32.totalorder %s21, 1
      %p133 = por %p131, %p132
      %p134 = scmp.ne.s32.totalorder %s123, %s124
      %p135 = scmp.eq.s32.totalorder %s21, 0
      %p136 = por %p134, %p135
      %p137 = scmp.ne.s32.totalorder %s123, %s124
      %p138 = scmp.eq.s32.totalorder %s22, 1
      %p139 = por %p137, %p138
      %p141 = scmp.ne.s32.totalorder %s124, %s140
      %p142 = scmp.eq.s32.totalorder %s22, 0
      %p143 = por %p141, %p142
      %p144 = scmp.le.s32.totalorder 1, %s16
      %p145 = scmp.lt.s32.totalorder %s16, 3
      %p146 = pnand %p144, %p145
      %p147 = pneg %p146
      // Predicated region
      $region9: #{tpu_custom_call.1} parent=5 // pred_check
        _
      $region10: #{tpu_custom_call.1} parent=5 // pred_check_branch
        %149 = sbr.rel (%p146) target = $region12
      $region11: #{tpu_custom_call.1} parent=5 // pred_region
        %s150 = ssub.s32 %s16, 1
        // Predicated region
        $region13: #{tpu_custom_call.1} parent=11 // pred_check
          %p151 = pneg %p82
        $region14: #{tpu_custom_call.1} parent=11 // pred_check_branch
          %153 = sbr.rel (%p151) target = $region16
        $region15: #{tpu_custom_call.1} parent=11 // pred_region
          %s154 = smul.u32 2, %s26
          %s156 = ssub.s32 256, 256
          %157 = vsyncadd [#allocation6], %s156
          %s158 = smul.addr %s154, 128
          %s159 = scalar_lea.hbm %s1, %s158
          %s160 = sshll.u32 [#allocation5], 4
          %s161 = int_to_ptr.vmem [resolvable:$true] %s160
          %166 = dma.hbm_to_vmem [thread:$0]  %s159, 256, %s161, [#allocation6], 128, 128, 8
        $region16: #{tpu_custom_call.1} parent=11 // pred_fallthru
          _
        // Predicated region
        $region17: #{tpu_custom_call.1} parent=11 // pred_check
          %p167 = pneg %p108
        $region18: #{tpu_custom_call.1} parent=11 // pred_check_branch
          %169 = sbr.rel (%p167) target = $region20
        $region19: #{tpu_custom_call.1} parent=11 // pred_region
          %s170 = smul.u32 2, %s26
          %s172 = ssub.s32 256, 256
          %173 = vsyncadd [#allocation6], %s172
          %s174 = smul.addr %s170, 128
          %s175 = scalar_lea.hbm %s2, %s174
          %s176 = sshll.u32 [#allocation7], 4
          %s177 = int_to_ptr.vmem [resolvable:$true] %s176
          %182 = dma.hbm_to_vmem [thread:$0]  %s175, 256, %s177, [#allocation6], 128, 128, 8
        $region20: #{tpu_custom_call.1} parent=11 // pred_fallthru
          _
      $region12: #{tpu_custom_call.1} parent=5 // pred_fallthru
        _
      %p183 = scmp.lt.s32.totalorder %s16, 2
      // Predicated region
      $region21: #{tpu_custom_call.1} parent=5 // pred_check
        %p184 = pneg %p183
      $region22: #{tpu_custom_call.1} parent=5 // pred_check_branch
        %186 = sbr.rel (%p184) target = $region24
      $region23: #{tpu_custom_call.1} parent=5 // pred_region
        // Predicated region
        $region25: #{tpu_custom_call.1} parent=23 // pred_check
          %p187 = pneg %p50
        $region26: #{tpu_custom_call.1} parent=23 // pred_check_branch
          %189 = sbr.rel (%p187) target = $region28
        $region27: #{tpu_custom_call.1} parent=23 // pred_region
          %s190 = sand.u32 %s40, 1
          %s191 = scalar_lea.sflag [#allocation3], %s190
          %s192 = sand.u32 %s40, 1
          %s193 = smul.addr %s192, 64
          %s194 = scalar_lea.vmem [#allocation2], %s193
          %s195 = smul.u32 4, %s23
          %s196 = smul.u32 2, %s24
          %s198 = ssub.s32 1024, 1024
          %199 = vsyncadd %s191, %s198
          %s200 = smul.addr %s195, 2
          %s201 = sadd.s32 %s196, %s200
          %s202 = smul.addr %s201, 128
          %s203 = scalar_lea.hbm %s0, %s202
          %s204 = sshll.u32 %s194, 4
          %s205 = int_to_ptr.vmem [resolvable:$true] %s204
          %210 = dma.hbm_to_vmem [thread:$0]  %s203, 1024, %s205, %s191, 128, 128, 8
        $region28: #{tpu_custom_call.1} parent=23 // pred_fallthru
          _
      $region24: #{tpu_custom_call.1} parent=5 // pred_fallthru
        _
      %p211 = scmp.le.s32.totalorder 1, %s16
      %p212 = scmp.lt.s32.totalorder %s16, 3
      %p213 = pnand %p211, %p212
      %p214 = pneg %p213
      // Predicated region
      $region29: #{tpu_custom_call.1} parent=5 // pred_check
        _
      $region30: #{tpu_custom_call.1} parent=5 // pred_check_branch
        %216 = sbr.rel (%p213) target = $region32
      $region31: #{tpu_custom_call.1} parent=5 // pred_region
        %s217 = ssub.s32 %s16, 1
        %s218 = sand.u32 %s43, 1
        %s219 = scalar_lea.sflag [#allocation3], %s218
        %s220 = sand.u32 %s43, 1
        %s221 = smul.addr %s220, 64
        %s222 = scalar_lea.vmem [#allocation2], %s221
        // Predicated region
        $region33: #{tpu_custom_call.1} parent=31 // pred_check
          %p223 = pneg %p56
        $region34: #{tpu_custom_call.1} parent=31 // pred_check_branch
          %225 = sbr.rel (%p223) target = $region36
        $region35: #{tpu_custom_call.1} parent=31 // pred_region
          %226 = dma.done %s219, 1024
        $region36: #{tpu_custom_call.1} parent=31 // pred_fallthru
          _
        // Predicated region
        $region37: #{tpu_custom_call.1} parent=31 // pred_check
          %p227 = pneg %p82
        $region38: #{tpu_custom_call.1} parent=31 // pred_check_branch
          %229 = sbr.rel (%p227) target = $region40
        $region39: #{tpu_custom_call.1} parent=31 // pred_region
          %230 = dma.done [#allocation6], 256
        $region40: #{tpu_custom_call.1} parent=31 // pred_fallthru
          _
        // Predicated region
        $region41: #{tpu_custom_call.1} parent=31 // pred_check
          %p231 = pneg %p108
        $region42: #{tpu_custom_call.1} parent=31 // pred_check_branch
          %233 = sbr.rel (%p231) target = $region44
        $region43: #{tpu_custom_call.1} parent=31 // pred_region
          %234 = dma.done [#allocation6], 256
        $region44: #{tpu_custom_call.1} parent=31 // pred_fallthru
          _
        %s235 = sand.u32 %s43, 1
        %s236 = scalar_lea.sflag [#allocation3], %s235
        %s237 = sand.u32 %s43, 1
        %s238 = smul.addr %s237, 64
        %s239 = scalar_lea.vmem [#allocation2], %s238
        %p240 = pneg %p56
        %p241 = pneg %p53
        %p242 = pneg %p82
        %p243 = pneg %p79
        %p244 = pneg %p108
        %p245 = pneg %p105
        %p246 = pneg %p136
        %p247 = pneg %p133
        %s248 = sand.u32 %s123, 1
        %s249 = scalar_lea.sflag [#allocation4], %s248
        %s250 = sand.u32 %s123, 1
        %s251 = smul.addr %s250, 64
        %s252 = scalar_lea.vmem [#allocation8], %s251
        %s253 = smul.u32 4, %s25
        %s254 = smul.u32 2, %s26
        %s255 = smul.u32 2, %s26
        %s256 = smul.u32 2, %s26
        %s257 = smul.u32 4, %s25
        %s258 = smul.u32 2, %s26
        %v259 = vld [vmem:[%s222] sm:$0xff]
        %v260 = vld [vmem:[%s222 + $0x8] sm:$0xff]
        %v261 = vld [vmem:[%s222 + $0x10] sm:$0xff]
        %v262 = vld [vmem:[%s222 + $0x18] sm:$0xff]
        %v263 = vld [vmem:[%s222 + $0x20] sm:$0xff]
        %v264 = vld [vmem:[%s222 + $0x28] sm:$0xff]
        %v265 = vld [vmem:[%s222 + $0x30] sm:$0xff]
        %v266 = vld [vmem:[%s222 + $0x38] sm:$0xff]
        %267 = vrot.lane.b32.xlu0 %v259, 64
        %v268 = vpop.permute.xlu0 %267
        %269 = vrot.lane.b32.xlu0 %v260, 64
        %v270 = vpop.permute.xlu0 %269
        %271 = vrot.lane.b32.xlu0 %v261, 64
        %v272 = vpop.permute.xlu0 %271
        %273 = vrot.lane.b32.xlu0 %v262, 64
        %v274 = vpop.permute.xlu0 %273
        %275 = vrot.lane.b32.xlu0 %v263, 64
        %v276 = vpop.permute.xlu0 %275
        %277 = vrot.lane.b32.xlu0 %v264, 64
        %v278 = vpop.permute.xlu0 %277
        %279 = vrot.lane.b32.xlu0 %v265, 64
        %v280 = vpop.permute.xlu0 %279
        %281 = vrot.lane.b32.xlu0 %v266, 64
        %v282 = vpop.permute.xlu0 %281
        %v283 = vld [vmem:[#allocation5] sm:$0xff]
        %v284 = vld [vmem:[#allocation5 + $0x8] sm:$0xff]
        %v285 = vmul.f32 %v259, %v283
        %v286 = vmul.f32 %v260, %v284
        %v287 = vmul.f32 %v261, %v283
        %v288 = vmul.f32 %v262, %v284
        %v289 = vmul.f32 %v263, %v283
        %v290 = vmul.f32 %v264, %v284
        %v291 = vmul.f32 %v265, %v283
        %v292 = vmul.f32 %v266, %v284
        %v293 = vld [vmem:[#allocation7] sm:$0xff]
        %v294 = vld [vmem:[#allocation7 + $0x8] sm:$0xff]
        %v295 = vmul.f32 %v268, %v293
        %v296 = vmul.f32 %v270, %v294
        %v297 = vmul.f32 %v272, %v293
        %v298 = vmul.f32 %v274, %v294
        %v299 = vmul.f32 %v276, %v293
        %v300 = vmul.f32 %v278, %v294
        %v301 = vmul.f32 %v280, %v293
        %v302 = vmul.f32 %v282, %v294
        %v303 = vadd.f32 %v285, %v295
        %v304 = vadd.f32 %v286, %v296
        %v305 = vadd.f32 %v287, %v297
        %v306 = vadd.f32 %v288, %v298
        %v307 = vadd.f32 %v289, %v299
        %v308 = vadd.f32 %v290, %v300
        %v309 = vadd.f32 %v291, %v301
        %v310 = vadd.f32 %v292, %v302
        %311 = vst [vmem:[%s252] sm:$0xff] %v303
        %312 = vst [vmem:[%s252 + $0x8] sm:$0xff] %v304
        %313 = vst [vmem:[%s252 + $0x10] sm:$0xff] %v305
        %314 = vst [vmem:[%s252 + $0x18] sm:$0xff] %v306
        %315 = vst [vmem:[%s252 + $0x20] sm:$0xff] %v307
        %316 = vst [vmem:[%s252 + $0x28] sm:$0xff] %v308
        %317 = vst [vmem:[%s252 + $0x30] sm:$0xff] %v309
        %318 = vst [vmem:[%s252 + $0x38] sm:$0xff] %v310
        %s319 = sand.u32 %s123, 1
        %s320 = scalar_lea.sflag [#allocation4], %s319
        %s321 = sand.u32 %s123, 1
        %s322 = smul.addr %s321, 64
        %s323 = scalar_lea.vmem [#allocation8], %s322
        // Predicated region
        $region45: #{tpu_custom_call.1} parent=31 // pred_check
          %p324 = pneg %p133
        $region46: #{tpu_custom_call.1} parent=31 // pred_check_branch
          %326 = sbr.rel (%p324) target = $region48
        $region47: #{tpu_custom_call.1} parent=31 // pred_region
          %s327 = smul.u32 4, %s25
          %s328 = smul.u32 2, %s26
          %s330 = ssub.s32 1024, 1024
          %331 = vsyncadd %s320, %s330
          %s332 = smul.addr %s327, 2
          %s333 = sadd.s32 %s328, %s332
          %s334 = smul.addr %s333, 128
          %s335 = scalar_lea.hbm %s3, %s334
          %s336 = sshll.u32 %s323, 4
          %s337 = int_to_ptr.vmem [resolvable:$true] %s336
          %342 = dma.vmem_to_hbm [thread:$0]  %s337, 1024, %s335, %s320, 128, 128, 8
        $region48: #{tpu_custom_call.1} parent=31 // pred_fallthru
          _
      $region32: #{tpu_custom_call.1} parent=5 // pred_fallthru
        _
      %p343 = scmp.le.s32.totalorder 2, %s16
      // Predicated region
      $region49: #{tpu_custom_call.1} parent=5 // pred_check
        %p344 = pneg %p343
      $region50: #{tpu_custom_call.1} parent=5 // pred_check_branch
        %346 = sbr.rel (%p344) target = $region52
      $region51: #{tpu_custom_call.1} parent=5 // pred_region
        %s347 = ssub.s32 %s16, 2
        // Predicated region
        $region53: #{tpu_custom_call.1} parent=51 // pred_check
          %p348 = pneg %p139
        $region54: #{tpu_custom_call.1} parent=51 // pred_check_branch
          %350 = sbr.rel (%p348) target = $region56
        $region55: #{tpu_custom_call.1} parent=51 // pred_region
          %s351 = sand.u32 %s124, 1
          %s352 = scalar_lea.sflag [#allocation4], %s351
          %s353 = sand.u32 %s124, 1
          %s354 = smul.addr %s353, 64
          %s355 = scalar_lea.vmem [#allocation8], %s354
          %356 = dma.done %s352, 1024
        $region56: #{tpu_custom_call.1} parent=51 // pred_fallthru
          _
      $region52: #{tpu_custom_call.1} parent=5 // pred_fallthru
        _
    $region6: #{tpu_custom_call.1} parent=1 // loop_footer
      %s20 = sadd.s32 1, %s16
    $region7: #{tpu_custom_call.1} parent=1 // loop_footer_branch
      %15 = sbr.rel target = $region3
    $region8: #{tpu_custom_call.1} parent=1 // loop_exit
      _
    %357 = vsyncpa [#allocation3], 1
    %s358 = scalar_lea.sflag [#allocation3], 1
    %359 = vsyncpa %s358, 1
    %360 = vsyncpa [#allocation6], 1
    %361 = vsyncpa [#allocation4], 1
    %s362 = scalar_lea.sflag [#allocation4], 1
    %363 = vsyncpa %s362, 1

</llo_original>
